<compile_context>
chip_gen: v5e
topology: v5e:2x2
jax: 0.10.0
libtpu: 0.0.40
codegen_flags: <defaults>
</compile_context>

<pallas_src>
import functools

import jax
import jax.numpy as jnp
import numpy as np
from jax.experimental import pallas as pl
from jax.experimental.pallas import tpu as pltpu


def _csa_kernel(x_ref, w1t_ref, w2t_ref, w3_ref, masks_ref, o_ref, *, H, W):
    """x_ref: (Nb, C, H*W); w1t: (C, R); w2t: (R, C); w3: (3, 3) in SMEM;
    masks: (9, H*W) f32 validity masks (1/0) for the 3x3 taps."""
    HW = H * W
    x = x_ref[...].astype(jnp.float32)                     # (Nb, C, HW)

    # ---------------- channel attention (batched over Nb) ----------------
    pooled = jnp.mean(x, axis=2)                            # (Nb, C)  lane reduce
    h = jnp.dot(pooled, w1t_ref[...],
                preferred_element_type=jnp.float32)         # (Nb, R)
    h = h * jax.nn.sigmoid(h)                               # SiLU
    ca = jax.nn.sigmoid(
        jnp.dot(h, w2t_ref[...],
                preferred_element_type=jnp.float32))        # (Nb, C)

    # ---------------- spatial attention ----------------
    m = jnp.mean(x, axis=1)                                 # (Nb, HW) mean over C
    acc = jnp.zeros_like(m)
    for a in (-1, 0, 1):                                    # 3x3 cross-correlation
        for b in (-1, 0, 1):
            t = (a + 1) * 3 + (b + 1)
            off = a * W + b
            # shifted[i] = m[(i + off) mod HW]; wrap-around is killed by mask.
            shifted = m if off == 0 else pltpu.roll(m, (-off) % HW, 1)
            tap = w3_ref[a + 1, b + 1] * masks_ref[pl.ds(t, 1), :]   # (1, HW)
            acc = acc + tap * shifted
    sa = jax.nn.sigmoid(acc)                                # (Nb, HW)

    # ---------------- combine: single fused, lane-dense store -------------
    o_ref[...] = (x * ca[:, :, None] * sa[:, None, :]).astype(o_ref.dtype)


def rtg_channel_spatial_attention(x, w1, w2, w3, *, vmem_budget_bytes=24 << 20):
    """x: (N, C, H, W); w1: (R, C) 1x1 conv C->R; w2: (C, R) 1x1 conv R->C;
    w3: (3, 3) 3x3 conv on the channel mean. All bias-free (as in the module)."""
    N, C, H, W = x.shape
    R = w1.shape[0]
    HW = H * W

    # Lane-dense presentation: H*W on lanes; weights pre-transposed so the
    # in-kernel MLP is two plain (Nb, .)@(., .) matmuls.
    x_flat = x.reshape(N, C, HW)
    w1t = jnp.transpose(w1)                                 # (C, R)
    w2t = jnp.transpose(w2)                                 # (R, C)

    # Precomputed (static) 3x3 zero-padding validity masks in flat H*W space.
    hh = np.arange(HW) // W
    ww = np.arange(HW) % W
    masks_np = np.zeros((9, HW), np.float32)
    t = 0
    for a in (-1, 0, 1):
        for b in (-1, 0, 1):
            valid = (hh + a >= 0) & (hh + a < H) & (ww + b >= 0) & (ww + b < W)
            masks_np[t] = valid.astype(np.float32)
            t += 1
    masks = jnp.asarray(masks_np)

    # ---- pick the batch block Nb (amortize per-step overhead, fit VMEM) ----
    itemsize = jnp.dtype(x.dtype).itemsize
    per_image = C * HW * itemsize
    # double-buffered input + output blocks ~= 4x block bytes resident
    max_nb = max(1, int(vmem_budget_bytes // (4 * per_image)))
    nb = min(N, max_nb)
    # Prefer >= 2 grid steps (v7x has 2 TensorCores sharing HBM) but never at
    # the cost of shrinking a block below ~1 MiB (tiny tiles are overhead-bound).
    if N // nb < 2:
        half = max(1, nb // 2)
        if half * per_image >= (1 << 20):
            nb = half
    while N % nb:                                           # keep divisibility
        nb -= 1

    kernel = functools.partial(_csa_kernel, H=H, W=W)
    out_flat = pl.pallas_call(
        kernel,
        out_shape=jax.ShapeDtypeStruct((N, C, HW), x.dtype),
        grid_spec=pltpu.PrefetchScalarGridSpec(
            num_scalar_prefetch=0,
            grid=(N // nb,),
            in_specs=[
                pl.BlockSpec((nb, C, HW), lambda n: (n, 0, 0)),
                pl.BlockSpec((C, R), lambda n: (0, 0)),
                pl.BlockSpec((R, C), lambda n: (0, 0)),
                pl.BlockSpec(memory_space=pltpu.MemorySpace.SMEM),   # w3 (3,3)
                pl.BlockSpec((9, HW), lambda n: (0, 0)),             # masks
            ],
            out_specs=pl.BlockSpec((nb, C, HW), lambda n: (n, 0, 0)),
        ),
        compiler_params=pltpu.CompilerParams(
            dimension_semantics=("parallel",),
            # default scoped limit is 16 MiB (v5e) / 32 MiB (v6e, v7x); raise it
            # but stay well under v7x's 64 MiB physical VMEM.
            vmem_limit_bytes=48 << 20,
        ),
    )(x_flat, w1t, w2t, w3, masks)
    return out_flat.reshape(N, C, H, W)


def _reference(x, w1, w2, w3):
    """Pure-JAX reference of the PyTorch forward (correctness check)."""
    # channel attention
    pooled = jnp.mean(x, axis=(2, 3))                          # (N, C)
    h = jnp.einsum("rc,nc->nr", w1, pooled)
    h = h * jax.nn.sigmoid(h)
    ca = jax.nn.sigmoid(jnp.einsum("cr,nr->nc", w2, h))        # (N, C)
    ca = ca[:, :, None, None]
    # spatial attention
    m = jnp.mean(x, axis=1, keepdims=True)                     # (N, 1, H, W)
    mp = jnp.pad(m, ((0, 0), (0, 0), (1, 1), (1, 1)))
    H, W = x.shape[2], x.shape[3]
    acc = jnp.zeros_like(m)
    for di in range(3):
        for dj in range(3):
            acc = acc + w3[di, dj] * mp[:, :, di:di + H, dj:dj + W]
    sa = jax.nn.sigmoid(acc)                                   # (N, 1, H, W)
    return x * ca * sa


if __name__ == "__main__":
    N, C, H, W = 2, 4, 16, 16
    reduce_to = 2

    key = jax.random.PRNGKey(0)
    kx, k1, k2, k3 = jax.random.split(key, 4)
    x = jax.random.normal(kx, (N, C, H, W), dtype=jnp.float32)
    # deterministic synthetic weights (shapes from the nn.Conv2d defs, bias=False)
    w1 = jax.random.normal(k1, (reduce_to, C), dtype=jnp.float32) * 0.5   # 1x1 C->R
    w2 = jax.random.normal(k2, (C, reduce_to), dtype=jnp.float32) * 0.5   # 1x1 R->C
    w3 = jax.random.normal(k3, (3, 3), dtype=jnp.float32) * 0.3           # 3x3 1->1

    out = jax.block_until_ready(rtg_channel_spatial_attention(x, w1, w2, w3))
    ref = jax.block_until_ready(_reference(x, w1, w2, w3))
    np.testing.assert_allclose(np.asarray(out), np.asarray(ref),
                               rtol=1e-4, atol=1e-5)
    print("KERNEL_OK")
</pallas_src>

<mosaic_0001>
module attributes {stable_mosaic.version = 11 : i64} {
  func.func @_csa_kernel(%arg0: i32, %arg1: memref<2x4x256xf32, #tpu.memory_space<vmem>>, %arg2: memref<4x2xf32, #tpu.memory_space<vmem>>, %arg3: memref<2x4xf32, #tpu.memory_space<vmem>>, %arg4: memref<3x3xf32, #tpu.memory_space<smem>>, %arg5: memref<9x256xf32, #tpu.memory_space<vmem>>, %arg6: memref<2x4x256xf32, #tpu.memory_space<vmem>>) attributes {dimension_semantics = [#tpu.dimension_semantics<parallel>], iteration_bounds = array<i64: 1>, scalar_prefetch = 0 : i64, scratch_operands = 0 : i64, tpu.core_type = #tpu.core_type<tc>, window_params = [{transform_indices = @transform_0, window_bounds = array<i64: 2, 4, 256>}, {pipeline_mode = #tpu.pipeline_mode<synchronous>, transform_indices = @transform_1, window_bounds = array<i64: 4, 2>}, {pipeline_mode = #tpu.pipeline_mode<synchronous>, transform_indices = @transform_2, window_bounds = array<i64: 2, 4>}, {transform_indices = @transform_3, window_bounds = array<i64: 3, 3>}, {pipeline_mode = #tpu.pipeline_mode<synchronous>, transform_indices = @transform_4, window_bounds = array<i64: 9, 256>}, {transform_indices = @transform_5, window_bounds = array<i64: 2, 4, 256>}]} {
    %c0 = arith.constant 0 : index
    %c0_0 = arith.constant 0 : index
    %c0_1 = arith.constant 0 : index
    %0 = vector.load %arg1[%c0, %c0_0, %c0_1] : memref<2x4x256xf32, #tpu.memory_space<vmem>>, vector<2x4x256xf32>
    %cst = arith.constant dense<0.000000e+00> : vector<2x4xf32>
    %1 = vector.multi_reduction <add>, %0, %cst [2] : vector<2x4x256xf32> to vector<2x4xf32>
    %cst_2 = arith.constant 2.560000e+02 : f32
    %2 = vector.broadcast %cst_2 : f32 to vector<2x4xf32>
    %3 = arith.divf %1, %2 : vector<2x4xf32>
    %c0_3 = arith.constant 0 : index
    %c0_4 = arith.constant 0 : index
    %4 = vector.load %arg2[%c0_3, %c0_4] : memref<4x2xf32, #tpu.memory_space<vmem>>, vector<4x2xf32>
    %cst_5 = arith.constant dense<0.000000e+00> : vector<2x2xf32>
    %5 = tpu.matmul %3, %4, %cst_5 {dimension_numbers = #tpu.dot_dimension_numbers<[1], [0], [0], [1], [0, 0, 1, 1], [], []>} : vector<2x4xf32>, vector<4x2xf32>, vector<2x2xf32> -> vector<2x2xf32>
    %6 = arith.negf %5 : vector<2x2xf32>
    %7 = math.exp %6 : vector<2x2xf32>
    %cst_6 = arith.constant 1.000000e+00 : f32
    %8 = vector.broadcast %cst_6 : f32 to vector<2x2xf32>
    %9 = arith.addf %8, %7 : vector<2x2xf32>
    %10 = arith.divf %8, %9 : vector<2x2xf32>
    %11 = arith.mulf %5, %10 : vector<2x2xf32>
    %c0_7 = arith.constant 0 : index
    %c0_8 = arith.constant 0 : index
    %12 = vector.load %arg3[%c0_7, %c0_8] : memref<2x4xf32, #tpu.memory_space<vmem>>, vector<2x4xf32>
    %cst_9 = arith.constant dense<0.000000e+00> : vector<2x4xf32>
    %13 = tpu.matmul %11, %12, %cst_9 {dimension_numbers = #tpu.dot_dimension_numbers<[1], [0], [0], [1], [0, 0, 1, 1], [], []>} : vector<2x2xf32>, vector<2x4xf32>, vector<2x4xf32> -> vector<2x4xf32>
    %14 = arith.negf %13 : vector<2x4xf32>
    %15 = math.exp %14 : vector<2x4xf32>
    %cst_10 = arith.constant 1.000000e+00 : f32
    %16 = vector.broadcast %cst_10 : f32 to vector<2x4xf32>
    %17 = arith.addf %16, %15 : vector<2x4xf32>
    %18 = arith.divf %16, %17 : vector<2x4xf32>
    %cst_11 = arith.constant dense<0.000000e+00> : vector<2x256xf32>
    %19 = vector.multi_reduction <add>, %0, %cst_11 [1] : vector<2x4x256xf32> to vector<2x256xf32>
    %cst_12 = arith.constant 4.000000e+00 : f32
    %20 = vector.broadcast %cst_12 : f32 to vector<2x256xf32>
    %21 = arith.divf %19, %20 : vector<2x256xf32>
    %cst_13 = arith.constant 0.000000e+00 : f32
    %22 = vector.broadcast %cst_13 : f32 to vector<2x256xf32>
    %c17_i32 = arith.constant 17 : i32
    %23 = tpu.dynamic_rotate %21 by %c17_i32 dim 1 : vector<2x256xf32>, i32 -> vector<2x256xf32>
    %c0_14 = arith.constant 0 : index
    %c0_15 = arith.constant 0 : index
    %24 = memref.load %arg4[%c0_14, %c0_15] : memref<3x3xf32, #tpu.memory_space<smem>>
    %c0_16 = arith.constant 0 : index
    %c0_17 = arith.constant 0 : index
    %25 = vector.load %arg5[%c0_16, %c0_17] : memref<9x256xf32, #tpu.memory_space<vmem>>, vector<1x256xf32>
    %26 = vector.broadcast %24 : f32 to vector<1x256xf32>
    %27 = arith.mulf %26, %25 : vector<1x256xf32>
    %28 = vector.broadcast %27 : vector<1x256xf32> to vector<2x256xf32>
    %29 = arith.mulf %28, %23 : vector<2x256xf32>
    %30 = arith.addf %22, %29 : vector<2x256xf32>
    %c16_i32 = arith.constant 16 : i32
    %31 = tpu.dynamic_rotate %21 by %c16_i32 dim 1 : vector<2x256xf32>, i32 -> vector<2x256xf32>
    %c0_18 = arith.constant 0 : index
    %c1 = arith.constant 1 : index
    %32 = memref.load %arg4[%c0_18, %c1] : memref<3x3xf32, #tpu.memory_space<smem>>
    %c1_19 = arith.constant 1 : index
    %c0_20 = arith.constant 0 : index
    %33 = vector.load %arg5[%c1_19, %c0_20] : memref<9x256xf32, #tpu.memory_space<vmem>>, vector<1x256xf32>
    %34 = vector.broadcast %32 : f32 to vector<1x256xf32>
    %35 = arith.mulf %34, %33 : vector<1x256xf32>
    %36 = vector.broadcast %35 : vector<1x256xf32> to vector<2x256xf32>
    %37 = arith.mulf %36, %31 : vector<2x256xf32>
    %38 = arith.addf %30, %37 : vector<2x256xf32>
    %c15_i32 = arith.constant 15 : i32
    %39 = tpu.dynamic_rotate %21 by %c15_i32 dim 1 : vector<2x256xf32>, i32 -> vector<2x256xf32>
    %c0_21 = arith.constant 0 : index
    %c2 = arith.constant 2 : index
    %40 = memref.load %arg4[%c0_21, %c2] : memref<3x3xf32, #tpu.memory_space<smem>>
    %c2_22 = arith.constant 2 : index
    %c0_23 = arith.constant 0 : index
    %41 = vector.load %arg5[%c2_22, %c0_23] : memref<9x256xf32, #tpu.memory_space<vmem>>, vector<1x256xf32>
    %42 = vector.broadcast %40 : f32 to vector<1x256xf32>
    %43 = arith.mulf %42, %41 : vector<1x256xf32>
    %44 = vector.broadcast %43 : vector<1x256xf32> to vector<2x256xf32>
    %45 = arith.mulf %44, %39 : vector<2x256xf32>
    %46 = arith.addf %38, %45 : vector<2x256xf32>
    %c1_i32 = arith.constant 1 : i32
    %47 = tpu.dynamic_rotate %21 by %c1_i32 dim 1 : vector<2x256xf32>, i32 -> vector<2x256xf32>
    %c1_24 = arith.constant 1 : index
    %c0_25 = arith.constant 0 : index
    %48 = memref.load %arg4[%c1_24, %c0_25] : memref<3x3xf32, #tpu.memory_space<smem>>
    %c3 = arith.constant 3 : index
    %c0_26 = arith.constant 0 : index
    %49 = vector.load %arg5[%c3, %c0_26] : memref<9x256xf32, #tpu.memory_space<vmem>>, vector<1x256xf32>
    %50 = vector.broadcast %48 : f32 to vector<1x256xf32>
    %51 = arith.mulf %50, %49 : vector<1x256xf32>
    %52 = vector.broadcast %51 : vector<1x256xf32> to vector<2x256xf32>
    %53 = arith.mulf %52, %47 : vector<2x256xf32>
    %54 = arith.addf %46, %53 : vector<2x256xf32>
    %c1_27 = arith.constant 1 : index
    %c1_28 = arith.constant 1 : index
    %55 = memref.load %arg4[%c1_27, %c1_28] : memref<3x3xf32, #tpu.memory_space<smem>>
    %c4 = arith.constant 4 : index
    %c0_29 = arith.constant 0 : index
    %56 = vector.load %arg5[%c4, %c0_29] : memref<9x256xf32, #tpu.memory_space<vmem>>, vector<1x256xf32>
    %57 = vector.broadcast %55 : f32 to vector<1x256xf32>
    %58 = arith.mulf %57, %56 : vector<1x256xf32>
    %59 = vector.broadcast %58 : vector<1x256xf32> to vector<2x256xf32>
    %60 = arith.mulf %59, %21 : vector<2x256xf32>
    %61 = arith.addf %54, %60 : vector<2x256xf32>
    %c255_i32 = arith.constant 255 : i32
    %62 = tpu.dynamic_rotate %21 by %c255_i32 dim 1 : vector<2x256xf32>, i32 -> vector<2x256xf32>
    %c1_30 = arith.constant 1 : index
    %c2_31 = arith.constant 2 : index
    %63 = memref.load %arg4[%c1_30, %c2_31] : memref<3x3xf32, #tpu.memory_space<smem>>
    %c5 = arith.constant 5 : index
    %c0_32 = arith.constant 0 : index
    %64 = vector.load %arg5[%c5, %c0_32] : memref<9x256xf32, #tpu.memory_space<vmem>>, vector<1x256xf32>
    %65 = vector.broadcast %63 : f32 to vector<1x256xf32>
    %66 = arith.mulf %65, %64 : vector<1x256xf32>
    %67 = vector.broadcast %66 : vector<1x256xf32> to vector<2x256xf32>
    %68 = arith.mulf %67, %62 : vector<2x256xf32>
    %69 = arith.addf %61, %68 : vector<2x256xf32>
    %c241_i32 = arith.constant 241 : i32
    %70 = tpu.dynamic_rotate %21 by %c241_i32 dim 1 : vector<2x256xf32>, i32 -> vector<2x256xf32>
    %c2_33 = arith.constant 2 : index
    %c0_34 = arith.constant 0 : index
    %71 = memref.load %arg4[%c2_33, %c0_34] : memref<3x3xf32, #tpu.memory_space<smem>>
    %c6 = arith.constant 6 : index
    %c0_35 = arith.constant 0 : index
    %72 = vector.load %arg5[%c6, %c0_35] : memref<9x256xf32, #tpu.memory_space<vmem>>, vector<1x256xf32>
    %73 = vector.broadcast %71 : f32 to vector<1x256xf32>
    %74 = arith.mulf %73, %72 : vector<1x256xf32>
    %75 = vector.broadcast %74 : vector<1x256xf32> to vector<2x256xf32>
    %76 = arith.mulf %75, %70 : vector<2x256xf32>
    %77 = arith.addf %69, %76 : vector<2x256xf32>
    %c240_i32 = arith.constant 240 : i32
    %78 = tpu.dynamic_rotate %21 by %c240_i32 dim 1 : vector<2x256xf32>, i32 -> vector<2x256xf32>
    %c2_36 = arith.constant 2 : index
    %c1_37 = arith.constant 1 : index
    %79 = memref.load %arg4[%c2_36, %c1_37] : memref<3x3xf32, #tpu.memory_space<smem>>
    %c7 = arith.constant 7 : index
    %c0_38 = arith.constant 0 : index
    %80 = vector.load %arg5[%c7, %c0_38] : memref<9x256xf32, #tpu.memory_space<vmem>>, vector<1x256xf32>
    %81 = vector.broadcast %79 : f32 to vector<1x256xf32>
    %82 = arith.mulf %81, %80 : vector<1x256xf32>
    %83 = vector.broadcast %82 : vector<1x256xf32> to vector<2x256xf32>
    %84 = arith.mulf %83, %78 : vector<2x256xf32>
    %85 = arith.addf %77, %84 : vector<2x256xf32>
    %c239_i32 = arith.constant 239 : i32
    %86 = tpu.dynamic_rotate %21 by %c239_i32 dim 1 : vector<2x256xf32>, i32 -> vector<2x256xf32>
    %c2_39 = arith.constant 2 : index
    %c2_40 = arith.constant 2 : index
    %87 = memref.load %arg4[%c2_39, %c2_40] : memref<3x3xf32, #tpu.memory_space<smem>>
    %c8 = arith.constant 8 : index
    %c0_41 = arith.constant 0 : index
    %88 = vector.load %arg5[%c8, %c0_41] : memref<9x256xf32, #tpu.memory_space<vmem>>, vector<1x256xf32>
    %89 = vector.broadcast %87 : f32 to vector<1x256xf32>
    %90 = arith.mulf %89, %88 : vector<1x256xf32>
    %91 = vector.broadcast %90 : vector<1x256xf32> to vector<2x256xf32>
    %92 = arith.mulf %91, %86 : vector<2x256xf32>
    %93 = arith.addf %85, %92 : vector<2x256xf32>
    %94 = arith.negf %93 : vector<2x256xf32>
    %95 = math.exp %94 : vector<2x256xf32>
    %cst_42 = arith.constant 1.000000e+00 : f32
    %96 = vector.broadcast %cst_42 : f32 to vector<2x256xf32>
    %97 = arith.addf %96, %95 : vector<2x256xf32>
    %98 = arith.divf %96, %97 : vector<2x256xf32>
    %99 = vector.shape_cast %18 : vector<2x4xf32> to vector<2x4x1xf32>
    %100 = vector.broadcast %99 : vector<2x4x1xf32> to vector<2x4x256xf32>
    %101 = arith.mulf %0, %100 : vector<2x4x256xf32>
    %102 = vector.shape_cast %98 : vector<2x256xf32> to vector<2x1x256xf32>
    %103 = vector.broadcast %102 : vector<2x1x256xf32> to vector<2x4x256xf32>
    %104 = arith.mulf %101, %103 : vector<2x4x256xf32>
    %c0_43 = arith.constant 0 : index
    %c0_44 = arith.constant 0 : index
    %c0_45 = arith.constant 0 : index
    %105 = vector.load %arg6[%c0_43, %c0_44, %c0_45] : memref<2x4x256xf32, #tpu.memory_space<vmem>>, vector<2x4x256xf32>
    tpu.vector_store %arg6[%c0_43, %c0_44, %c0_45], %104 {strides = array<i32>} : memref<2x4x256xf32, #tpu.memory_space<vmem>>, vector<2x4x256xf32>,
    return
  }
  func.func @transform_0(%arg0: i32) -> (i32, i32, i32) {
    %c0_i32 = arith.constant 0 : i32
    %c0_i32_0 = arith.constant 0 : i32
    %c0_i32_1 = arith.constant 0 : i32
    return %arg0, %c0_i32, %c0_i32_0 : i32, i32, i32
  }
  func.func @transform_1(%arg0: i32) -> (i32, i32) {
    %c0_i32 = arith.constant 0 : i32
    %c0_i32_0 = arith.constant 0 : i32
    %c0_i32_1 = arith.constant 0 : i32
    return %c0_i32, %c0_i32_0 : i32, i32
  }
  func.func @transform_2(%arg0: i32) -> (i32, i32) {
    %c0_i32 = arith.constant 0 : i32
    %c0_i32_0 = arith.constant 0 : i32
    %c0_i32_1 = arith.constant 0 : i32
    return %c0_i32, %c0_i32_0 : i32, i32
  }
  func.func @transform_3(%arg0: i32) -> (i32, i32) {
    %c0_i32 = arith.constant 0 : i32
    %c0_i32_0 = arith.constant 0 : i32
    %c0_i32_1 = arith.constant 0 : i32
    return %c0_i32, %c0_i32_0 : i32, i32
  }
  func.func @transform_4(%arg0: i32) -> (i32, i32) {
    %c0_i32 = arith.constant 0 : i32
    %c0_i32_0 = arith.constant 0 : i32
    %c0_i32_1 = arith.constant 0 : i32
    return %c0_i32, %c0_i32_0 : i32, i32
  }
  func.func @transform_5(%arg0: i32) -> (i32, i32, i32) {
    %c0_i32 = arith.constant 0 : i32
    %c0_i32_0 = arith.constant 0 : i32
    %c0_i32_1 = arith.constant 0 : i32
    return %arg0, %c0_i32, %c0_i32_0 : i32, i32, i32
  }
}

</mosaic_0001>

<llo_original>
// kernel: tpu_custom_call.1
$region0: #{tpu_custom_call.1}
  #allocation0 [shape = 'u32[]', space=smem, size = 0x4, offset = 0x4, fixed_abs, tag = 'smem constant byte address 0x4 - core index']
  #allocation1 [shape = 'u32[72,128]{1,0:T(1,128)}', space=vmem, size = 0x9000, scoped, tag = 'internal scratch']
  %s0 = inlined_call_operand.hbm [shape: f32[2,4,256], index: 0, kind: input, shape index: {}]
  %s1 = inlined_call_operand.vmem [shape: f32[4,2], index: 1, kind: input, shape index: {}]
  %s2 = inlined_call_operand.vmem [shape: f32[2,4], index: 2, kind: input, shape index: {}]
  %s3 = inlined_call_operand.vmem [shape: f32[3,3], index: 3, kind: input, shape index: {}]
  %s4 = inlined_call_operand.hbm [shape: f32[9,256], index: 4, kind: input, shape index: {}]
  %s5 = inlined_call_operand.hbm [shape: f32[2,4,256], index: 5, kind: output, shape index: {}]
  %s6 = sld [smem:[#allocation0]]
  $region42: #{tpu_custom_call.1} parent=0
    _
  %s8 = ssub.s32 1, %s6
  %s9 = scalar_select 0, %s8, %s6
  $region1: #{tpu_custom_call.1} parent=0
    #allocation2 [shape = 'u8[8192]{0}', space=vmem, size = 0x2000, scoped, tag = 'input window, operand 0, single buffered']
    #allocation3 [shape = 's32[1]{0}', space=sflag, size = 0x4, scoped, tag = 'scoped memory for tpu_custom_call.1']
    #allocation4 [shape = 's32[1]{0}', space=sflag, size = 0x4, scoped, tag = 'scoped memory for tpu_custom_call.1']
    #allocation5 [shape = 's32[1]{0}', space=sflag, size = 0x4, scoped, tag = 'scoped memory for tpu_custom_call.1']
    #allocation6 [shape = 'u8[2048]{0}', space=smem, size = 0x800, scoped, tag = 'input window, operand 3, single buffered']
    #allocation7 [shape = 'u8[16384]{0}', space=vmem, size = 0x4000, scoped, tag = 'input window, operand 4, single buffered']
    #allocation8 [shape = 's32[1]{0}', space=sflag, size = 0x4, scoped, tag = 'scoped memory for tpu_custom_call.1']
    #allocation9 [shape = 'u8[8192]{0}', space=vmem, size = 0x2000, scoped, tag = 'output window, operand 0, single buffered']
    %10 = vsyncpa [#allocation3], 0
    %11 = vsyncpa [#allocation5], 0
    %12 = vsyncpa [#allocation8], 0
    %13 = vsyncpa [#allocation4], 0
    // Predicated region
    $region2: #{tpu_custom_call.1} parent=1 // pred_check
      _
    $region3: #{tpu_custom_call.1} parent=1 // pred_check_branch
      %15 = sbr.rel (0) target = $region5
    $region4: #{tpu_custom_call.1} parent=1 // pred_region
      %17 = vsyncadd [#allocation3], 0
      %s18 = sshll.u32 %s0, 4
      %s19 = int_to_ptr.hbm [resolvable:$true] %s18
      %s20 = sshll.u32 [#allocation2], 4
      %s21 = int_to_ptr.vmem [resolvable:$true] %s20
      %26 = dma.hbm_to_vmem [thread:$0]  %s19, 256, %s21, [#allocation3], 128, 128, 8
    $region5: #{tpu_custom_call.1} parent=1 // pred_fallthru
      _
    // Predicated region
    $region6: #{tpu_custom_call.1} parent=1 // pred_check
      _
    $region7: #{tpu_custom_call.1} parent=1 // pred_check_branch
      %28 = sbr.rel (0) target = $region9
    $region8: #{tpu_custom_call.1} parent=1 // pred_region
      _
    $region9: #{tpu_custom_call.1} parent=1 // pred_fallthru
      _
    // Predicated region
    $region10: #{tpu_custom_call.1} parent=1 // pred_check
      _
    $region11: #{tpu_custom_call.1} parent=1 // pred_check_branch
      %30 = sbr.rel (0) target = $region13
    $region12: #{tpu_custom_call.1} parent=1 // pred_region
      _
    $region13: #{tpu_custom_call.1} parent=1 // pred_fallthru
      _
    // Predicated region
    $region14: #{tpu_custom_call.1} parent=1 // pred_check
      _
    $region15: #{tpu_custom_call.1} parent=1 // pred_check_branch
      %32 = sbr.rel (0) target = $region17
    $region16: #{tpu_custom_call.1} parent=1 // pred_region
      %34 = vsyncadd [#allocation5], 0
      %s36 = sshll.u32 %s3, 4
      %s37 = int_to_ptr.vmem [resolvable:$true] %s36
      %39 = dma.vmem_to_smem %s37, 64, [#allocation6], [#allocation5]
    $region17: #{tpu_custom_call.1} parent=1 // pred_fallthru
      _
    // Predicated region
    $region18: #{tpu_custom_call.1} parent=1 // pred_check
      _
    $region19: #{tpu_custom_call.1} parent=1 // pred_check_branch
      %41 = sbr.rel (0) target = $region21
    $region20: #{tpu_custom_call.1} parent=1 // pred_region
      %43 = vsyncadd [#allocation8], 0
      %s44 = sshll.u32 %s4, 4
      %s45 = int_to_ptr.hbm [resolvable:$true] %s44
      %s46 = sshll.u32 [#allocation7], 4
      %s47 = int_to_ptr.vmem [resolvable:$true] %s46
      %52 = dma.hbm_to_vmem [thread:$0]  %s45, 512, %s47, [#allocation8], 256, 256, 16
    $region21: #{tpu_custom_call.1} parent=1 // pred_fallthru
      _
    // Predicated region
    $region22: #{tpu_custom_call.1} parent=1 // pred_check
      _
    $region23: #{tpu_custom_call.1} parent=1 // pred_check_branch
      %54 = sbr.rel (0) target = $region25
    $region24: #{tpu_custom_call.1} parent=1 // pred_region
      %56 = dma.done [#allocation3], 256
    $region25: #{tpu_custom_call.1} parent=1 // pred_fallthru
      _
    // Predicated region
    $region26: #{tpu_custom_call.1} parent=1 // pred_check
      _
    $region27: #{tpu_custom_call.1} parent=1 // pred_check_branch
      %58 = sbr.rel (0) target = $region29
    $region28: #{tpu_custom_call.1} parent=1 // pred_region
      %60 = dma.done [#allocation5], 64
    $region29: #{tpu_custom_call.1} parent=1 // pred_fallthru
      _
    // Predicated region
    $region30: #{tpu_custom_call.1} parent=1 // pred_check
      _
    $region31: #{tpu_custom_call.1} parent=1 // pred_check_branch
      %62 = sbr.rel (0) target = $region33
    $region32: #{tpu_custom_call.1} parent=1 // pred_region
      %64 = dma.done [#allocation8], 512
    $region33: #{tpu_custom_call.1} parent=1 // pred_fallthru
      _
    %65 = sfence
    %v66 = vld [vmem:[#allocation2] sm:$0xff]
    %v67 = vld [vmem:[#allocation2 + $0x8] sm:$0xff]
    %70 = vst [vmem:[#allocation1] ss:$2 sm:$0xff] %v66
    %v71 = vld.sshfl [vmem:[#allocation1] sm:$0xff pattern:$0x75316420]
    %v72 = vld.sshfl [vmem:[#allocation1 + $0x8] sm:$0xff pattern:$0x75316420]
    %s73 = scalar_lea.vmem [#allocation1], 16
    %74 = vst [vmem:[%s73] ss:$2 sm:$0xff] %v67
    %v75 = vld.sshfl [vmem:[#allocation1 + $0x10] sm:$0xff pattern:$0x75316420]
    %v76 = vld.sshfl [vmem:[#allocation1 + $0x18] sm:$0xff pattern:$0x75316420]
    %vm81 = vcmask 1043456
    %v82 = vsel %vm81, %v71, 0.0
    %v83 = vsel %vm81, %v72, 0.0
    %v84 = vadd.f32 %v82, %v83
    %85 = vadd.xlane.f32.xlu0 %v84
    %v86 = vpop.xlane.xlu0 %85
    %v87 = vsel %vm81, %v75, 0.0
    %v88 = vsel %vm81, %v76, 0.0
    %v89 = vadd.f32 %v87, %v88
    %90 = vadd.xlane.f32.xlu0 %v89
    %v91 = vpop.xlane.xlu0 %90
    %v92 = vrcp.pop 256.0
    %v93 = vmul.f32 256.0, %v92
    %v94 = vsub.f32 1.0, %v93
    %v95 = vmul.f32 %v92, %v94
    %v96 = vadd.f32 %v92, %v95
    %vm97 = vweird.f32 %v92
    %v98 = vsel %vm97, %v92, %v96
    %v99 = vmul.f32 %v86, %v98
    %v100 = vmul.f32 %v91, %v98
    %v101 = vld [vmem:[%s1] sm:$0xf]
    %v104 = vlaneseq
    %v105 = vand.u32 %v104, 127
    %v106 = vperm.slane %v99, %v105
    %v107 = vperm.slane %v100, %v105
    %vm108 = vcmask 1041409
    %v109 = vsel %vm108, %v107, %v106
    %vm110 = vcmask 31744
    %v111 = vsel %vm110, %v109, 0
    %v114 = vsel %vm81, %v101, 0
    %116 = vmatpush.msra.mxu0 0.0
    %117 = vmatpush.msra.mxu0 0.0
    %118 = vmatpush.msra.mxu0 0.0
    %119 = vmatpush.msra.mxu0 0.0
    %120 = vmatpush.msra.mxu0 0.0
    %121 = vmatpush.msra.mxu0 0.0
    %122 = vmatpush.msra.mxu0 0.0
    %123 = vmatpush.msra.mxu0 0.0
    %124 = vmatpush.msra.mxu0 0.0
    %125 = vmatpush.msra.mxu0 0.0
    %126 = vmatpush.msra.mxu0 0.0
    %127 = vmatpush.msra.mxu0 0.0
    %128 = vmatpush.msra.mxu0 0.0
    %129 = vmatpush.msra.mxu0 0.0
    %130 = vmatpush.msra.mxu0 0.0
    %131 = vmatpush.msra.mxu0 %v114
    %132 = vmatmul.f32.gmra.mxu0 %v111
    %v133 = vpop.f32.mrf.mxu0
    %v134 = vadd.f32 0.0, %v133
    %135 = vdwg.mxu0
    %v136 = vxor.u32 %v134, 2147483648
    %v137 = vmul.f32 %v136, 1.442695
    %v138 = vpow.pop %v137
    %v139 = vadd.f32 %v138, 1.0
    %v140 = vrcp.pop %v139
    %v141 = vmul.f32 %v139, %v140
    %v142 = vsub.f32 1.0, %v141
    %v143 = vmul.f32 %v140, %v142
    %v144 = vadd.f32 %v140, %v143
    %vm145 = vweird.f32 %v139
    %vm146 = vweird.f32 %v140
    %vm147 = vmor %vm145, %vm146
    %v148 = vsel %vm147, %v140, %v144
    %v149 = vand.u32 2147483647, %v139
    %vm150 = vcmp.eq.f32.partialorder %v149, 8.507059e+37
    %v151 = vand.u32 %v139, 2147483648
    %v152 = vor.u32 1.1754944e-38, %v151
    %v153 = vsel %vm150, %v152, %v148
    %v154 = vmul.f32 1.0, %v153
    %v155 = vmul.f32 %v134, %v154
    %v156 = vld [vmem:[%s2] sm:$0x3]
    %vm157 = vcmask 15360
    %v159 = vsel %vm157, %v155, 0
    %vm161 = vcmask 1041408
    %v163 = vsel %vm161, %v156, 0
    %165 = vmatpush.msra.mxu0 0.0
    %166 = vmatpush.msra.mxu0 0.0
    %167 = vmatpush.msra.mxu0 0.0
    %168 = vmatpush.msra.mxu0 0.0
    %169 = vmatpush.msra.mxu0 0.0
    %170 = vmatpush.msra.mxu0 0.0
    %171 = vmatpush.msra.mxu0 0.0
    %172 = vmatpush.msra.mxu0 0.0
    %173 = vmatpush.msra.mxu0 0.0
    %174 = vmatpush.msra.mxu0 0.0
    %175 = vmatpush.msra.mxu0 0.0
    %176 = vmatpush.msra.mxu0 0.0
    %177 = vmatpush.msra.mxu0 0.0
    %178 = vmatpush.msra.mxu0 0.0
    %179 = vmatpush.msra.mxu0 0.0
    %180 = vmatpush.msra.mxu0 %v163
    %181 = vmatmul.f32.gmra.mxu0 %v159
    %v182 = vpop.f32.mrf.mxu0
    %v183 = vadd.f32 0.0, %v182
    %184 = vdwg.mxu0
    %v185 = vxor.u32 %v183, 2147483648
    %v186 = vmul.f32 %v185, 1.442695
    %v187 = vpow.pop %v186
    %v188 = vadd.f32 %v187, 1.0
    %v189 = vrcp.pop %v188
    %v190 = vmul.f32 %v188, %v189
    %v191 = vsub.f32 1.0, %v190
    %v192 = vmul.f32 %v189, %v191
    %v193 = vadd.f32 %v189, %v192
    %vm194 = vweird.f32 %v188
    %vm195 = vweird.f32 %v189
    %vm196 = vmor %vm194, %vm195
    %v197 = vsel %vm196, %v189, %v193
    %v198 = vand.u32 2147483647, %v188
    %vm199 = vcmp.eq.f32.partialorder %v198, 8.507059e+37
    %v200 = vand.u32 %v188, 2147483648
    %v201 = vor.u32 1.1754944e-38, %v200
    %v202 = vsel %vm199, %v201, %v197
    %v203 = vmul.f32 1.0, %v202
    %204 = vst [vmem:[#allocation1] ss:$2 sm:$0xff] %v66
    %v205 = vld.sshfl [vmem:[#allocation1] sm:$0xff pattern:$0x75316420]
    %v206 = vld.sshfl [vmem:[#allocation1 + $0x8] sm:$0xff pattern:$0x75316420]
    %s207 = scalar_lea.vmem [#allocation1], 16
    %208 = vst [vmem:[%s207] ss:$2 sm:$0xff] %v67
    %v209 = vld.sshfl [vmem:[#allocation1 + $0x10] sm:$0xff pattern:$0x75316420]
    %v210 = vld.sshfl [vmem:[#allocation1 + $0x18] sm:$0xff pattern:$0x75316420]
    %v215 = vsel %vm81, %v205, 0.0
    %v216 = vrot.slane %v215, 4
    %v217 = vadd.f32 %v215, %v216
    %v218 = vrot.slane %v217, 2
    %v219 = vadd.f32 %v217, %v218
    %v220 = vrot.slane %v219, 1
    %v221 = vadd.f32 %v219, %v220
    %v222 = vsel %vm81, %v206, 0.0
    %v223 = vrot.slane %v222, 4
    %v224 = vadd.f32 %v222, %v223
    %v225 = vrot.slane %v224, 2
    %v226 = vadd.f32 %v224, %v225
    %v227 = vrot.slane %v226, 1
    %v228 = vadd.f32 %v226, %v227
    %v229 = vsel %vm81, %v209, 0.0
    %v230 = vrot.slane %v229, 4
    %v231 = vadd.f32 %v229, %v230
    %v232 = vrot.slane %v231, 2
    %v233 = vadd.f32 %v231, %v232
    %v234 = vrot.slane %v233, 1
    %v235 = vadd.f32 %v233, %v234
    %v236 = vsel %vm81, %v210, 0.0
    %v237 = vrot.slane %v236, 4
    %v238 = vadd.f32 %v236, %v237
    %v239 = vrot.slane %v238, 2
    %v240 = vadd.f32 %v238, %v239
    %v241 = vrot.slane %v240, 1
    %v242 = vadd.f32 %v240, %v241
    %v243 = vrcp.pop 4.0
    %v244 = vmul.f32 4.0, %v243
    %v245 = vsub.f32 1.0, %v244
    %v246 = vmul.f32 %v243, %v245
    %v247 = vadd.f32 %v243, %v246
    %vm248 = vweird.f32 %v243
    %v249 = vsel %vm248, %v243, %v247
    %v250 = vmul.f32 %v221, %v249
    %v251 = vmul.f32 %v228, %v249
    %v252 = vmul.f32 %v235, %v249
    %v253 = vmul.f32 %v242, %v249
    %v258 = vsel %vm108, %v252, %v250
    %v259 = vsel %vm108, %v253, %v251
    %262 = vrot.lane.b32.xlu0 %v258, 17
    %v263 = vpop.permute.xlu0 %262
    %264 = vrot.lane.b32.xlu0 %v259, 17
    %v265 = vpop.permute.xlu0 %264
    %vm266 = vcmp.lt.s32.totalorder %v105, 17
    %v267 = vsel %vm266, %v263, %v265
    %v268 = vsel %vm266, %v265, %v263
    %s269 = sld [smem:[#allocation6]]
    %v270 = vld [vmem:[#allocation7] ss:$8 sm:$0x3]
    %v271 = vstv %s269
    %v272 = vmul.f32 %v271, %v270
    %v274 = vperm.slane %v272, 0
    %v275 = vperm.slane %v272, 1
    %v278 = vmul.f32 %v274, %v268
    %v279 = vmul.f32 %v275, %v267
    %v280 = vadd.f32 %v278, 0.0
    %v281 = vadd.f32 %v279, 0.0
    %282 = vrot.lane.b32.xlu0 %v258, 16
    %v283 = vpop.permute.xlu0 %282
    %284 = vrot.lane.b32.xlu0 %v259, 16
    %v285 = vpop.permute.xlu0 %284
    %vm286 = vcmp.lt.s32.totalorder %v105, 16
    %v287 = vsel %vm286, %v283, %v285
    %v288 = vsel %vm286, %v285, %v283
    %s289 = sld [smem:[#allocation6 + $0x1]]
    %s290 = scalar_lea.vmem [#allocation7], 1
    %v291 = vld [vmem:[%s290] ss:$8 sm:$0x3]
    %v292 = vstv %s289
    %v293 = vmul.f32 %v292, %v291
    %v295 = vperm.slane %v293, 0
    %v296 = vperm.slane %v293, 1
    %v299 = vmul.f32 %v295, %v288
    %v300 = vmul.f32 %v296, %v287
    %v301 = vadd.f32 %v280, %v299
    %v302 = vadd.f32 %v281, %v300
    %303 = vrot.lane.b32.xlu0 %v258, 15
    %v304 = vpop.permute.xlu0 %303
    %305 = vrot.lane.b32.xlu0 %v259, 15
    %v306 = vpop.permute.xlu0 %305
    %vm307 = vcmp.lt.s32.totalorder %v105, 15
    %v308 = vsel %vm307, %v304, %v306
    %v309 = vsel %vm307, %v306, %v304
    %s310 = sld [smem:[#allocation6 + $0x2]]
    %s311 = scalar_lea.vmem [#allocation7], 2
    %v312 = vld [vmem:[%s311] ss:$8 sm:$0x3]
    %v313 = vstv %s310
    %v314 = vmul.f32 %v313, %v312
    %v316 = vperm.slane %v314, 0
    %v317 = vperm.slane %v314, 1
    %v320 = vmul.f32 %v316, %v309
    %v321 = vmul.f32 %v317, %v308
    %v322 = vadd.f32 %v301, %v320
    %v323 = vadd.f32 %v302, %v321
    %324 = vrot.lane.b32.xlu0 %v258, 1
    %v325 = vpop.permute.xlu0 %324
    %326 = vrot.lane.b32.xlu0 %v259, 1
    %v327 = vpop.permute.xlu0 %326
    %vm328 = vcmp.lt.s32.totalorder %v105, 1
    %v329 = vsel %vm328, %v325, %v327
    %v330 = vsel %vm328, %v327, %v325
    %s331 = sld [smem:[#allocation6 + $0x80]]
    %s332 = scalar_lea.vmem [#allocation7], 3
    %v333 = vld [vmem:[%s332] ss:$8 sm:$0x3]
    %v334 = vstv %s331
    %v335 = vmul.f32 %v334, %v333
    %v337 = vperm.slane %v335, 0
    %v338 = vperm.slane %v335, 1
    %v341 = vmul.f32 %v337, %v330
    %v342 = vmul.f32 %v338, %v329
    %v343 = vadd.f32 %v322, %v341
    %v344 = vadd.f32 %v323, %v342
    %s345 = sld [smem:[#allocation6 + $0x81]]
    %s346 = scalar_lea.vmem [#allocation7], 4
    %v347 = vld [vmem:[%s346] ss:$8 sm:$0x3]
    %v348 = vstv %s345
    %v349 = vmul.f32 %v348, %v347
    %v351 = vperm.slane %v349, 0
    %v352 = vperm.slane %v349, 1
    %v355 = vmul.f32 %v351, %v258
    %v356 = vmul.f32 %v352, %v259
    %v357 = vadd.f32 %v343, %v355
    %v358 = vadd.f32 %v344, %v356
    %359 = vrot.lane.b32.xlu0 %v258, 127
    %v360 = vpop.permute.xlu0 %359
    %361 = vrot.lane.b32.xlu0 %v259, 127
    %v362 = vpop.permute.xlu0 %361
    %vm363 = vcmp.lt.s32.totalorder %v105, 127
    %v364 = vsel %vm363, %v360, %v362
    %v365 = vsel %vm363, %v362, %v360
    %s366 = sld [smem:[#allocation6 + $0x82]]
    %s367 = scalar_lea.vmem [#allocation7], 5
    %v368 = vld [vmem:[%s367] ss:$8 sm:$0x3]
    %v369 = vstv %s366
    %v370 = vmul.f32 %v369, %v368
    %v372 = vperm.slane %v370, 0
    %v373 = vperm.slane %v370, 1
    %v376 = vmul.f32 %v372, %v364
    %v377 = vmul.f32 %v373, %v365
    %v378 = vadd.f32 %v357, %v376
    %v379 = vadd.f32 %v358, %v377
    %380 = vrot.lane.b32.xlu0 %v258, 113
    %v381 = vpop.permute.xlu0 %380
    %382 = vrot.lane.b32.xlu0 %v259, 113
    %v383 = vpop.permute.xlu0 %382
    %vm384 = vcmp.lt.s32.totalorder %v105, 113
    %v385 = vsel %vm384, %v381, %v383
    %v386 = vsel %vm384, %v383, %v381
    %s387 = sld [smem:[#allocation6 + $0x100]]
    %s388 = scalar_lea.vmem [#allocation7], 6
    %v389 = vld [vmem:[%s388] ss:$8 sm:$0x3]
    %v390 = vstv %s387
    %v391 = vmul.f32 %v390, %v389
    %v393 = vperm.slane %v391, 0
    %v394 = vperm.slane %v391, 1
    %v397 = vmul.f32 %v393, %v385
    %v398 = vmul.f32 %v394, %v386
    %v399 = vadd.f32 %v378, %v397
    %v400 = vadd.f32 %v379, %v398
    %401 = vrot.lane.b32.xlu0 %v258, 112
    %v402 = vpop.permute.xlu0 %401
    %403 = vrot.lane.b32.xlu0 %v259, 112
    %v404 = vpop.permute.xlu0 %403
    %vm405 = vcmp.lt.s32.totalorder %v105, 112
    %v406 = vsel %vm405, %v402, %v404
    %v407 = vsel %vm405, %v404, %v402
    %s408 = sld [smem:[#allocation6 + $0x101]]
    %s409 = scalar_lea.vmem [#allocation7], 7
    %v410 = vld [vmem:[%s409] ss:$8 sm:$0x3]
    %v411 = vstv %s408
    %v412 = vmul.f32 %v411, %v410
    %v414 = vperm.slane %v412, 0
    %v415 = vperm.slane %v412, 1
    %v418 = vmul.f32 %v414, %v406
    %v419 = vmul.f32 %v415, %v407
    %v420 = vadd.f32 %v399, %v418
    %v421 = vadd.f32 %v400, %v419
    %422 = vrot.lane.b32.xlu0 %v258, 111
    %v423 = vpop.permute.xlu0 %422
    %424 = vrot.lane.b32.xlu0 %v259, 111
    %v425 = vpop.permute.xlu0 %424
    %vm426 = vcmp.lt.s32.totalorder %v105, 111
    %v427 = vsel %vm426, %v423, %v425
    %v428 = vsel %vm426, %v425, %v423
    %s429 = sld [smem:[#allocation6 + $0x102]]
    %s430 = scalar_lea.vmem [#allocation7], 16
    %v431 = vld [vmem:[%s430] ss:$8 sm:$0x3]
    %v432 = vstv %s429
    %v433 = vmul.f32 %v432, %v431
    %v435 = vperm.slane %v433, 0
    %v436 = vperm.slane %v433, 1
    %v439 = vmul.f32 %v435, %v427
    %v440 = vmul.f32 %v436, %v428
    %v441 = vadd.f32 %v420, %v439
    %v442 = vadd.f32 %v421, %v440
    %v443 = vxor.u32 %v441, 2147483648
    %v444 = vxor.u32 %v442, 2147483648
    %v445 = vmul.f32 %v443, 1.442695
    %v446 = vpow.pop %v445
    %v447 = vmul.f32 %v444, 1.442695
    %v448 = vpow.pop %v447
    %v449 = vadd.f32 %v446, 1.0
    %v450 = vadd.f32 %v448, 1.0
    %v451 = vrcp.pop %v449
    %v452 = vmul.f32 %v449, %v451
    %v453 = vsub.f32 1.0, %v452
    %v454 = vmul.f32 %v451, %v453
    %v455 = vadd.f32 %v451, %v454
    %vm456 = vweird.f32 %v449
    %vm457 = vweird.f32 %v451
    %vm458 = vmor %vm456, %vm457
    %v459 = vsel %vm458, %v451, %v455
    %v460 = vand.u32 2147483647, %v449
    %vm461 = vcmp.eq.f32.partialorder %v460, 8.507059e+37
    %v462 = vand.u32 %v449, 2147483648
    %v463 = vor.u32 1.1754944e-38, %v462
    %v464 = vsel %vm461, %v463, %v459
    %v465 = vmul.f32 1.0, %v464
    %v466 = vrcp.pop %v450
    %v467 = vmul.f32 %v450, %v466
    %v468 = vsub.f32 1.0, %v467
    %v469 = vmul.f32 %v466, %v468
    %v470 = vadd.f32 %v466, %v469
    %vm471 = vweird.f32 %v450
    %vm472 = vweird.f32 %v466
    %vm473 = vmor %vm471, %vm472
    %v474 = vsel %vm473, %v466, %v470
    %v475 = vand.u32 2147483647, %v450
    %vm476 = vcmp.eq.f32.partialorder %v475, 8.507059e+37
    %v477 = vand.u32 %v450, 2147483648
    %v478 = vor.u32 1.1754944e-38, %v477
    %v479 = vsel %vm476, %v478, %v474
    %v480 = vmul.f32 1.0, %v479
    %v481 = vperm.slane %v203, 0
    %v482 = vlaneseq
    %v483 = vshrl.u32 %v482, 7
    %485 = vset.pattern.permute.xlu0 %v483
    %486 = vperm.xlu0 %485, %v481
    %v487 = vpop.permute.xlu0 %486
    %v488 = vperm.slane %v203, 1
    %v489 = vlaneseq
    %v490 = vshrl.u32 %v489, 7
    %492 = vset.pattern.permute.xlu0 %v490
    %493 = vperm.xlu0 %492, %v488
    %v494 = vpop.permute.xlu0 %493
    %v498 = vunpack.c.l.s4 839922192
    %v499 = vunpack.c.0.s8 %v498
    %v500 = vperm.slane %v487, %v499
    %v502 = vunpack.c.l.s4 839922192
    %v503 = vunpack.c.0.s8 %v502
    %v504 = vperm.slane %v494, %v503
    %v507 = vmul.f32 %v66, %v500
    %v508 = vmul.f32 %v67, %v504
    %v511 = vrot.slane %v480, 7
    %vm512 = vcmask 1040384
    %v513 = vsel %vm512, %v465, %v511
    %v514 = vsel %vm108, %v465, %v511
    %v515 = vrot.slane %v514, 1
    %v516 = vperm.slane %v513, 0
    %v517 = vperm.slane %v513, 1
    %v518 = vperm.slane %v515, 0
    %v519 = vperm.slane %v515, 1
    %v520 = vrot.slane %v517, 4
    %v521 = vrot.slane %v519, 4
    %v522 = vsel %vm81, %v516, %v520
    %v523 = vsel %vm81, %v518, %v521
    %v526 = vmul.f32 %v507, %v522
    %v527 = vmul.f32 %v508, %v523
    %528 = vst [vmem:[#allocation9] sm:$0xff] %v526
    %529 = vst [vmem:[#allocation9 + $0x8] sm:$0xff] %v527
    // Predicated region
    $region34: #{tpu_custom_call.1} parent=1 // pred_check
      _
    $region35: #{tpu_custom_call.1} parent=1 // pred_check_branch
      %531 = sbr.rel (0) target = $region37
    $region36: #{tpu_custom_call.1} parent=1 // pred_region
      %533 = vsyncadd [#allocation4], 0
      %s534 = sshll.u32 [#allocation9], 4
      %s535 = int_to_ptr.vmem [resolvable:$true] %s534
      %s536 = sshll.u32 %s5, 4
      %s537 = int_to_ptr.hbm [resolvable:$true] %s536
      %542 = dma.vmem_to_hbm [thread:$0]  %s535, 256, %s537, [#allocation4], 128, 128, 8
    $region37: #{tpu_custom_call.1} parent=1 // pred_fallthru
      _
    // Predicated region
    $region38: #{tpu_custom_call.1} parent=1 // pred_check
      _
    $region39: #{tpu_custom_call.1} parent=1 // pred_check_branch
      %544 = sbr.rel (0) target = $region41
    $region40: #{tpu_custom_call.1} parent=1 // pred_region
      %546 = dma.done [#allocation4], 256
    $region41: #{tpu_custom_call.1} parent=1 // pred_fallthru
      _
    %547 = vsyncpa [#allocation3], 1
    %548 = vsyncpa [#allocation8], 1
    %549 = vsyncpa [#allocation4], 1
    %550 = vsyncpa [#allocation5], 1

</llo_original>
